<compile_context>
chip_gen: v5e
topology: v5e:2x2
jax: 0.10.0
libtpu: 0.0.40
codegen_flags: <defaults>
</compile_context>

<pallas_src>
import jax
import jax.numpy as jnp
from jax.experimental import pallas as pl
from jax.experimental.pallas import tpu as pltpu


def _lambda_kernel(x_ref, f_out_ref, g_out_ref):
    # Minimal body: one load, two stores; everything hides under the DMAs.
    x = x_ref[...]
    f_out_ref[...] = jnp.maximum(x, 0)   # f = relu
    g_out_ref[...] = jnp.tanh(x)         # g = tanh
    # TODO(synk): if v7x bundle dumps show the single EUP slot saturating at
    # full HBM rate (~267 Gelem/s), switch tanh to an exp-based form with
    # pl.reciprocal(approx=True); on v5e/v6e tanh comfortably hides under DMA.


_LANE_CANDIDATES = (512, 256, 128)          # widest first; all multiples of 128
_TARGET_TILE_BYTES = 2 * 1024 * 1024        # per-array block (3 arrays x 2 bufs = 12 MiB)


def _round_up(v, m):
    return ((v + m - 1) // m) * m


def _choose_layout(n_elem, itemsize):
    """Pick a lane-dense 2-D slab (rows, lane) and a row-tile size.

    - lane is the widest multiple of 128 that divides n_elem (zero-copy path);
      otherwise 512 with a tiny (< lane elements) pad handled by the caller.
    - tile_rows is a multiple of the dtype's sublane count and sized so one
      block is ~2 MiB per array.
    - For large tensors we guarantee >= 4 grid steps (>= 2 pipelined
      iterations per v7x TensorCore).
    """
    lane = next((l for l in _LANE_CANDIDATES if n_elem % l == 0),
                _LANE_CANDIDATES[0])
    rows = pl.cdiv(n_elem, lane)

    sub = max(8, 32 // itemsize)            # sublane multiple: 8 f32, 16 bf16, 32 int8
    tile_rows = max(sub, _round_up(_TARGET_TILE_BYTES // (lane * itemsize), sub))

    if rows >= 4 * sub:
        # Split until there are at least 4 grid steps (v7x megacore pipelining).
        while tile_rows > sub and pl.cdiv(rows, tile_rows) < 4:
            tile_rows = max(sub, _round_up(tile_rows // 2, sub))
    else:
        tile_rows = min(tile_rows, _round_up(rows, sub))
    return rows, lane, tile_rows


def lambda_forward(x, *, force_pallas=False):
    """Computes (relu(x), tanh(x)) with a single fused Pallas kernel.

    x: float NCHW (or any-shape) array. Returns (f(x), g(x)) with x's
    shape/dtype.
    """
    orig_shape = x.shape
    n_elem = x.size
    itemsize = jnp.dtype(x.dtype).itemsize

    # KiB-scale tensors: kernel launch overhead dwarfs the work; let XLA fuse.
    if not force_pallas and n_elem * itemsize < (1 << 20):
        return jnp.maximum(x, 0), jnp.tanh(x)

    rows, lane, tile_rows = _choose_layout(n_elem, itemsize)
    padded = rows * lane
    needs_pad = padded != n_elem

    x_flat = x.reshape(-1)
    if needs_pad:
        # < lane elements of pad; allow_input_fusion lets XLA fuse this into
        # the pallas_call input DMA instead of materializing a padded copy.
        x_flat = jnp.pad(x_flat, (0, padded - n_elem))
    x2d = x_flat.reshape(rows, lane)

    grid = (pl.cdiv(rows, tile_rows),)      # ragged last row-block is masked
    block = pl.BlockSpec((tile_rows, lane), lambda i: (i, 0))

    f2d, g2d = pl.pallas_call(
        _lambda_kernel,
        out_shape=(
            jax.ShapeDtypeStruct((rows, lane), x.dtype),
            jax.ShapeDtypeStruct((rows, lane), x.dtype),
        ),
        grid=grid,
        in_specs=[block],
        out_specs=(block, block),
        compiler_params=pltpu.CompilerParams(
            dimension_semantics=("parallel",),
            vmem_limit_bytes=32 * 1024 * 1024,
            allow_input_fusion=[True] if needs_pad else None,
        ),
        cost_estimate=pl.CostEstimate(
            flops=n_elem,                        # relu compare/select
            transcendentals=n_elem,              # tanh
            bytes_accessed=3 * n_elem * itemsize,  # 1 read + 2 writes
        ),
    )(x2d)

    if needs_pad:
        f_out = f2d.reshape(-1)[:n_elem].reshape(orig_shape)
        g_out = g2d.reshape(-1)[:n_elem].reshape(orig_shape)
    else:
        # Zero-copy path: reshape only (no pad on input, no slice on output).
        f_out = f2d.reshape(orig_shape)
        g_out = g2d.reshape(orig_shape)
    return f_out, g_out


if __name__ == "__main__":
    key = jax.random.PRNGKey(0)

    # Small NCHW input consistent with the module: batch=2, channels=4, 16x16.
    x_small = jax.random.normal(key, (2, 4, 16, 16), dtype=jnp.float32)
    f_s, g_s = lambda_forward(x_small, force_pallas=True)   # exercise the kernel
    jax.block_until_ready((f_s, g_s))
    assert f_s.shape == x_small.shape and g_s.shape == x_small.shape
    assert jnp.allclose(f_s, jnp.maximum(x_small, 0.0), atol=1e-5, rtol=1e-5)
    assert jnp.allclose(g_s, jnp.tanh(x_small), atol=1e-5, rtol=1e-5)

    # Ragged size (not a multiple of 128) to exercise the pad/slice branch.
    x_rag = jax.random.normal(jax.random.PRNGKey(2), (2, 3, 5, 7), dtype=jnp.float32)
    f_r, g_r = lambda_forward(x_rag, force_pallas=True)
    jax.block_until_ready((f_r, g_r))
    assert f_r.shape == x_rag.shape and g_r.shape == x_rag.shape
    assert jnp.allclose(f_r, jnp.maximum(x_rag, 0.0), atol=1e-5, rtol=1e-5)
    assert jnp.allclose(g_r, jnp.tanh(x_rag), atol=1e-5, rtol=1e-5)

    # Larger aligned input: zero-copy path, multi-block pipeline, >= 4 grid steps.
    x_big = jax.random.normal(jax.random.PRNGKey(1), (8, 64, 64, 64),
                              dtype=jnp.float32)
    f_b, g_b = lambda_forward(x_big)
    jax.block_until_ready((f_b, g_b))
    assert jnp.allclose(f_b, jnp.maximum(x_big, 0.0), atol=1e-5, rtol=1e-5)
    assert jnp.allclose(g_b, jnp.tanh(x_big), atol=1e-5, rtol=1e-5)

    print("KERNEL_OK")
</pallas_src>

<mosaic_0001>
module attributes {stable_mosaic.version = 11 : i64} {
  func.func @_lambda_kernel(%arg0: i32, %arg1: memref<8x512xf32, #tpu.memory_space<vmem>>, %arg2: memref<8x512xf32, #tpu.memory_space<vmem>>, %arg3: memref<8x512xf32, #tpu.memory_space<vmem>>) attributes {dimension_semantics = [#tpu.dimension_semantics<parallel>], iteration_bounds = array<i64: 1>, scalar_prefetch = 0 : i64, scratch_operands = 0 : i64, tpu.core_type = #tpu.core_type<tc>, window_params = [{transform_indices = @transform_0, window_bounds = array<i64: 8, 512>}, {transform_indices = @transform_1, window_bounds = array<i64: 8, 512>}, {transform_indices = @transform_2, window_bounds = array<i64: 8, 512>}]} {
    %c0 = arith.constant 0 : index
    %c0_0 = arith.constant 0 : index
    %0 = vector.load %arg1[%c0, %c0_0] : memref<8x512xf32, #tpu.memory_space<vmem>>, vector<8x512xf32>
    %cst = arith.constant 0.000000e+00 : f32
    %1 = vector.broadcast %cst : f32 to vector<8x512xf32>
    %2 = arith.maximumf %0, %1 : vector<8x512xf32>
    %c0_1 = arith.constant 0 : index
    %c0_2 = arith.constant 0 : index
    %3 = vector.load %arg2[%c0_1, %c0_2] : memref<8x512xf32, #tpu.memory_space<vmem>>, vector<8x512xf32>
    tpu.vector_store %arg2[%c0_1, %c0_2], %2 {strides = array<i32>} : memref<8x512xf32, #tpu.memory_space<vmem>>, vector<8x512xf32>,
    %4 = math.tanh %0 : vector<8x512xf32>
    %c0_3 = arith.constant 0 : index
    %c0_4 = arith.constant 0 : index
    %5 = vector.load %arg3[%c0_3, %c0_4] : memref<8x512xf32, #tpu.memory_space<vmem>>, vector<8x512xf32>
    tpu.vector_store %arg3[%c0_3, %c0_4], %4 {strides = array<i32>} : memref<8x512xf32, #tpu.memory_space<vmem>>, vector<8x512xf32>,
    return
  }
  func.func @transform_0(%arg0: i32) -> (i32, i32) {
    %c0_i32 = arith.constant 0 : i32
    %c0_i32_0 = arith.constant 0 : i32
    return %arg0, %c0_i32 : i32, i32
  }
  func.func @transform_1(%arg0: i32) -> (i32, i32) {
    %c0_i32 = arith.constant 0 : i32
    %c0_i32_0 = arith.constant 0 : i32
    return %arg0, %c0_i32 : i32, i32
  }
  func.func @transform_2(%arg0: i32) -> (i32, i32) {
    %c0_i32 = arith.constant 0 : i32
    %c0_i32_0 = arith.constant 0 : i32
    return %arg0, %c0_i32 : i32, i32
  }
}

</mosaic_0001>

<llo_original>
// kernel: tpu_custom_call.1
$region0: #{tpu_custom_call.1}
  #allocation0 [shape = 'u32[]', space=smem, size = 0x4, offset = 0x4, fixed_abs, tag = 'smem constant byte address 0x4 - core index']
  #allocation1 [shape = 'u32[72,128]{1,0:T(1,128)}', space=vmem, size = 0x9000, scoped, tag = 'internal scratch']
  %s0 = inlined_call_operand.hbm [shape: f32[4,512], index: 0, kind: input, shape index: {}]
  %s1 = inlined_call_operand.hbm [shape: f32[4,512], index: 1, kind: output, shape index: {0}]
  %s2 = inlined_call_operand.hbm [shape: f32[4,512], index: 2, kind: output, shape index: {1}]
  %3 = xla_tuple %s1, %s2
  %s4 = sld [smem:[#allocation0]]
  $region26: #{tpu_custom_call.1} parent=0
    _
  %s6 = ssub.s32 1, %s4
  %s7 = scalar_select 0, %s6, %s4
  $region1: #{tpu_custom_call.1} parent=0
    #allocation2 [shape = 'u8[16384]{0}', space=vmem, size = 0x4000, scoped, tag = 'input window, operand 0, single buffered']
    #allocation3 [shape = 's32[1]{0}', space=sflag, size = 0x4, scoped, tag = 'scoped memory for tpu_custom_call.1']
    #allocation4 [shape = 's32[1]{0}', space=sflag, size = 0x4, scoped, tag = 'scoped memory for tpu_custom_call.1']
    #allocation5 [shape = 'u8[16384]{0}', space=vmem, size = 0x4000, scoped, tag = 'output window, operand 0, single buffered']
    #allocation6 [shape = 'u8[16384]{0}', space=vmem, size = 0x4000, scoped, tag = 'output window, operand 1, single buffered']
    #allocation7 [shape = 's32[1]{0}', space=sflag, size = 0x4, scoped, tag = 'scoped memory for tpu_custom_call.1']
    %8 = vsyncpa [#allocation3], 0
    %9 = vsyncpa [#allocation4], 0
    %10 = vsyncpa [#allocation7], 0
    // Predicated region
    $region2: #{tpu_custom_call.1} parent=1 // pred_check
      _
    $region3: #{tpu_custom_call.1} parent=1 // pred_check_branch
      %12 = sbr.rel (0) target = $region5
    $region4: #{tpu_custom_call.1} parent=1 // pred_region
      %14 = vsyncadd [#allocation3], 256
      %s15 = sshll.u32 %s0, 4
      %s16 = int_to_ptr.hbm [resolvable:$true] %s15
      %s17 = sshll.u32 [#allocation2], 4
      %s18 = int_to_ptr.vmem [resolvable:$true] %s17
      %23 = dma.hbm_to_vmem [thread:$0]  %s16, 256, %s18, [#allocation3], 256, 256, 16
    $region5: #{tpu_custom_call.1} parent=1 // pred_fallthru
      _
    // Predicated region
    $region6: #{tpu_custom_call.1} parent=1 // pred_check
      _
    $region7: #{tpu_custom_call.1} parent=1 // pred_check_branch
      %25 = sbr.rel (0) target = $region9
    $region8: #{tpu_custom_call.1} parent=1 // pred_region
      %27 = dma.done [#allocation3], 512
    $region9: #{tpu_custom_call.1} parent=1 // pred_fallthru
      _
    %v28 = vld [vmem:[#allocation2] sm:$0xff]
    %v29 = vld [vmem:[#allocation2 + $0x8] sm:$0xff]
    %v30 = vld [vmem:[#allocation2 + $0x10] sm:$0xff]
    %v31 = vld [vmem:[#allocation2 + $0x18] sm:$0xff]
    %v32 = vmax.f32 %v28, 0.0
    %v33 = vmax.f32 %v29, 0.0
    %v34 = vmax.f32 %v30, 0.0
    %v35 = vmax.f32 %v31, 0.0
    %36 = vst [vmem:[#allocation5] sm:$0xff] %v32
    %37 = vst [vmem:[#allocation5 + $0x8] sm:$0xff] %v33
    %38 = vst [vmem:[#allocation5 + $0x10] sm:$0xff] %v34
    %39 = vst [vmem:[#allocation5 + $0x18] sm:$0xff] %v35
    %v40 = vtanh.pop %v28
    %v41 = vtanh.pop %v29
    %v42 = vtanh.pop %v30
    %v43 = vtanh.pop %v31
    %44 = vst [vmem:[#allocation6] sm:$0xff] %v40
    %45 = vst [vmem:[#allocation6 + $0x8] sm:$0xff] %v41
    %46 = vst [vmem:[#allocation6 + $0x10] sm:$0xff] %v42
    %47 = vst [vmem:[#allocation6 + $0x18] sm:$0xff] %v43
    // Predicated region
    $region10: #{tpu_custom_call.1} parent=1 // pred_check
      _
    $region11: #{tpu_custom_call.1} parent=1 // pred_check_branch
      %49 = sbr.rel (0) target = $region13
    $region12: #{tpu_custom_call.1} parent=1 // pred_region
      %51 = vsyncadd [#allocation4], 256
      %s52 = sshll.u32 [#allocation5], 4
      %s53 = int_to_ptr.vmem [resolvable:$true] %s52
      %s54 = sshll.u32 %s1, 4
      %s55 = int_to_ptr.hbm [resolvable:$true] %s54
      %60 = dma.vmem_to_hbm [thread:$0]  %s53, 256, %s55, [#allocation4], 256, 256, 16
    $region13: #{tpu_custom_call.1} parent=1 // pred_fallthru
      _
    // Predicated region
    $region14: #{tpu_custom_call.1} parent=1 // pred_check
      _
    $region15: #{tpu_custom_call.1} parent=1 // pred_check_branch
      %62 = sbr.rel (0) target = $region17
    $region16: #{tpu_custom_call.1} parent=1 // pred_region
      %64 = vsyncadd [#allocation7], 256
      %s65 = sshll.u32 [#allocation6], 4
      %s66 = int_to_ptr.vmem [resolvable:$true] %s65
      %s67 = sshll.u32 %s2, 4
      %s68 = int_to_ptr.hbm [resolvable:$true] %s67
      %73 = dma.vmem_to_hbm [thread:$0]  %s66, 256, %s68, [#allocation7], 256, 256, 16
    $region17: #{tpu_custom_call.1} parent=1 // pred_fallthru
      _
    // Predicated region
    $region18: #{tpu_custom_call.1} parent=1 // pred_check
      _
    $region19: #{tpu_custom_call.1} parent=1 // pred_check_branch
      %75 = sbr.rel (0) target = $region21
    $region20: #{tpu_custom_call.1} parent=1 // pred_region
      %77 = dma.done [#allocation4], 512
    $region21: #{tpu_custom_call.1} parent=1 // pred_fallthru
      _
    // Predicated region
    $region22: #{tpu_custom_call.1} parent=1 // pred_check
      _
    $region23: #{tpu_custom_call.1} parent=1 // pred_check_branch
      %79 = sbr.rel (0) target = $region25
    $region24: #{tpu_custom_call.1} parent=1 // pred_region
      %81 = dma.done [#allocation7], 512
    $region25: #{tpu_custom_call.1} parent=1 // pred_fallthru
      _
    %82 = vsyncpa [#allocation3], 1
    %83 = vsyncpa [#allocation4], 1
    %84 = vsyncpa [#allocation7], 1

</llo_original>
